<compile_context>
chip_gen: v5e
topology: v5e:2x2
jax: 0.10.0
libtpu: 0.0.40
codegen_flags: <defaults>
</compile_context>

<pallas_src>
import functools

import jax
import jax.numpy as jnp
from jax.experimental import pallas as pl
from jax.experimental.pallas import tpu as pltpu


def _base_gnn_kernel(feats_ref, memb_ref, slab_ref, out_ref, *,
                     n_tasks, feat_dim, hidden):
    T, F, H = n_tasks, feat_dim, hidden
    TH, TF = T * H, T * F
    eps = 1e-5

    feats = feats_ref[...]                       # (N, F)
    memb = memb_ref[...]                         # (G, N)
    G = memb.shape[0]

    # ---- static views into the packed parameter slab ----
    r = 0
    watt = slab_ref[r:r + F, 0:T]; r += F        # (F, T)   attention weights
    w1b = slab_ref[r:r + TF, 0:TH]; r += TF      # (T*F, T*H) block-diagonal
    w2b = slab_ref[r:r + TH, 0:TH]; r += TH      # (T*H, T*H) block-diagonal
    w3b = slab_ref[r:r + TH, 0:TH]; r += TH      # (T*H, T*H) block-diagonal
    wob = slab_ref[r:r + TH, 0:T]; r += TH       # (T*H, T)   block-diagonal
    vec = slab_ref[r:r + 11, 0:TH]               # (11, T*H) packed bias rows

    b1, g1, be1 = vec[0:1, :], vec[1:2, :], vec[2:3, :]
    b2, g2, be2 = vec[3:4, :], vec[4:5, :], vec[5:6, :]
    b3, g3, be3 = vec[6:7, :], vec[7:8, :], vec[8:9, :]
    bo = vec[9:10, 0:T]                          # (1, T)
    batt = vec[10:11, 0:T]                       # (1, T)

    # ---- WeightAndSum readout, weighted-membership formulation ----
    logits = jnp.dot(feats, watt, preferred_element_type=jnp.float32) + batt
    w = jax.nn.sigmoid(logits)                   # (N, T)
    wT = jnp.transpose(w)                        # (T, N) small transpose
    # task-major weighted membership: rows [t0g0..t0g_{G-1}, t1g0, ...]
    wm = jnp.concatenate([memb * wT[t:t + 1, :] for t in range(T)], axis=0)
    # single MXU contraction over the node axis: (T*G, N) x (N, F)
    mol_tg = jnp.dot(wm, feats, preferred_element_type=jnp.float32)
    # re-layout to (G, T*F) so the block-diagonal MLP is one matmul per stage
    mol = jnp.concatenate(
        [mol_tg[t * G:(t + 1) * G, :] for t in range(T)], axis=1)

    # ---- per-task MLP, block-diagonal weights: one matmul per stage ----
    def fc_bn(x, wblk, b, g, be):
        # Dropout(p=0.0) -> Linear -> ReLU -> BatchNorm1d (batch statistics)
        h = jnp.dot(x, wblk, preferred_element_type=jnp.float32) + b
        h = jnp.maximum(h, 0.0)
        mean = jnp.mean(h, axis=0, keepdims=True)
        cen = h - mean
        var = jnp.mean(cen * cen, axis=0, keepdims=True)
        return cen * jax.lax.rsqrt(var + eps) * g + be

    h1 = fc_bn(mol, w1b, b1, g1, be1)            # (G, T*H)
    h2 = fc_bn(h1, w2b, b2, g2, be2)
    h3 = fc_bn(h2, w3b, b3, g3, be3)

    pred = jnp.dot(h3, wob, preferred_element_type=jnp.float32) + bo
    out_ref[...] = pred.astype(out_ref.dtype)    # (G, T), lane-dense write


def _block_diag(w):
    """(T, A, B) stacked per-task weights -> (T*A, T*B) block-diagonal."""
    T, A, B = w.shape
    eye = jnp.eye(T, dtype=w.dtype)
    return jnp.einsum("ts,tab->tasb", eye, w).reshape(T * A, T * B)


def pack_params(params):
    """One-time packing of all per-task parameters into one lane-padded slab.

    Returns (slab, (n_tasks, feat_dim, hidden)). Call this once; the slab is
    reused verbatim by every forward call.
    """
    T, F, H = params["w1"].shape
    TH = T * H
    lanes = max(128, ((TH + 127) // 128) * 128)

    def pad_lanes(x):
        return jnp.pad(x, ((0, 0), (0, lanes - x.shape[1])))

    def row(x):
        return x.reshape(1, -1)

    def row_pad_th(x):
        rr = x.reshape(1, -1)
        return jnp.pad(rr, ((0, 0), (0, TH - rr.shape[1])))

    watt = jnp.transpose(params["watt"][:, :, 0], (1, 0))       # (F, T)
    vec = jnp.concatenate([
        row(params["b1"]), row(params["g1"]), row(params["be1"]),
        row(params["b2"]), row(params["g2"]), row(params["be2"]),
        row(params["b3"]), row(params["g3"]), row(params["be3"]),
        row_pad_th(params["bo"]), row_pad_th(params["batt"]),
    ], axis=0)                                                   # (11, T*H)

    slab = jnp.concatenate([
        pad_lanes(watt),                                         # F rows
        pad_lanes(_block_diag(params["w1"])),                    # T*F rows
        pad_lanes(_block_diag(params["w2"])),                    # T*H rows
        pad_lanes(_block_diag(params["w3"])),                    # T*H rows
        pad_lanes(_block_diag(params["wo"])),                    # T*H rows
        pad_lanes(vec),                                          # 11 rows
    ], axis=0)
    pad_r = (-slab.shape[0]) % 8
    if pad_r:
        slab = jnp.pad(slab, ((0, pad_r), (0, 0)))
    return slab, (T, F, H)


@functools.partial(jax.jit, static_argnames=("n_tasks", "feat_dim", "hidden"))
def base_gnn_forward(node_feats, membership, param_slab, *,
                     n_tasks, feat_dim, hidden):
    """node_feats: (N, F) f32; membership: (G, N) f32 0/1 one-hot;
    param_slab from pack_params(). Returns prediction_all: (G, n_tasks)."""
    G = membership.shape[0]
    vmem = pltpu.MemorySpace.VMEM
    return pl.pallas_call(
        functools.partial(_base_gnn_kernel, n_tasks=n_tasks,
                          feat_dim=feat_dim, hidden=hidden),
        out_shape=jax.ShapeDtypeStruct((G, n_tasks), jnp.float32),
        in_specs=[pl.BlockSpec(memory_space=vmem)] * 3,
        out_specs=pl.BlockSpec(memory_space=vmem),
    )(node_feats, membership, param_slab)


def _reference(node_feats, membership, params):
    """Pure-JAX reference of the same forward pass (for correctness check)."""
    T = params["w1"].shape[0]
    eps = 1e-5

    def fc_bn(x, W, b, g, be):
        h = jnp.maximum(x @ W + b, 0.0)
        mean = h.mean(0, keepdims=True)
        var = ((h - mean) ** 2).mean(0, keepdims=True)
        return (h - mean) / jnp.sqrt(var + eps) * g + be

    preds = []
    for t in range(T):
        w = jax.nn.sigmoid(node_feats @ params["watt"][t] + params["batt"][t])
        mol = membership @ (node_feats * w)
        h1 = fc_bn(mol, params["w1"][t], params["b1"][t],
                   params["g1"][t], params["be1"][t])
        h2 = fc_bn(h1, params["w2"][t], params["b2"][t],
                   params["g2"][t], params["be2"][t])
        h3 = fc_bn(h2, params["w3"][t], params["b3"][t],
                   params["g3"][t], params["be3"][t])
        preds.append(h3 @ params["wo"][t] + params["bo"][t])
    return jnp.concatenate(preds, axis=1)


def _init_params(key, n_tasks, gnn_out_feats, hidden):
    T, F, H = n_tasks, gnn_out_feats, hidden
    ks = jax.random.split(key, 10)

    def unif(k, shape, fan_in):
        bound = 1.0 / jnp.sqrt(fan_in)
        return jax.random.uniform(k, shape, jnp.float32, -bound, bound)

    return {
        # WeightAndSum.atom_weighting_specific[t]: Linear(F, 1)
        "watt": unif(ks[0], (T, F, 1), F),
        "batt": unif(ks[1], (T, 1, 1), F),
        # fc_layers1/2/3: Linear + BatchNorm1d (gamma=1, beta=0)
        "w1": unif(ks[2], (T, F, H), F),
        "b1": unif(ks[3], (T, 1, H), F),
        "g1": jnp.ones((T, 1, H), jnp.float32),
        "be1": jnp.zeros((T, 1, H), jnp.float32),
        "w2": unif(ks[4], (T, H, H), H),
        "b2": unif(ks[5], (T, 1, H), H),
        "g2": jnp.ones((T, 1, H), jnp.float32),
        "be2": jnp.zeros((T, 1, H), jnp.float32),
        "w3": unif(ks[6], (T, H, H), H),
        "b3": unif(ks[7], (T, 1, H), H),
        "g3": jnp.ones((T, 1, H), jnp.float32),
        "be3": jnp.zeros((T, 1, H), jnp.float32),
        # output_layer1[t]: Linear(H, 1)
        "wo": unif(ks[8], (T, H, 1), H),
        "bo": unif(ks[9], (T, 1, 1), H),
    }


if __name__ == "__main__":
    # Small, forward-consistent shapes:
    #   N = 32 nodes total, G = 2 graphs in the batch,
    #   gnn_out_feats = 32, classifier_hidden_feats = 32, n_tasks = 3.
    N, G, F, H, T = 32, 2, 32, 32, 3

    key = jax.random.PRNGKey(0)
    k_feat, k_param = jax.random.split(key)

    node_feats = jax.random.normal(k_feat, (N, F), jnp.float32)

    # First 16 nodes belong to graph 0, last 16 to graph 1.
    seg_ids = jnp.concatenate(
        [jnp.zeros((N // 2,), jnp.int32), jnp.ones((N - N // 2,), jnp.int32)])
    membership = (seg_ids[None, :] == jnp.arange(G)[:, None]).astype(jnp.float32)

    params = _init_params(k_param, T, F, H)

    # TODO(synk): gnn_layers is an empty ModuleList in BaseGNN.__init__, so no
    # graph-convolution layer exists to translate; etype/norm are never used.

    # One-time parameter packing (hoisted out of the per-call forward path).
    param_slab, (t_, f_, h_) = pack_params(params)
    param_slab = jax.block_until_ready(param_slab)

    pred = jax.block_until_ready(
        base_gnn_forward(node_feats, membership, param_slab,
                         n_tasks=t_, feat_dim=f_, hidden=h_))
    ref = jax.block_until_ready(_reference(node_feats, membership, params))

    assert pred.shape == (G, T), pred.shape
    assert jnp.allclose(pred, ref, atol=1e-4, rtol=1e-4), (pred, ref)
    print("KERNEL_OK")
</pallas_src>

<mosaic_0001>
module attributes {stable_mosaic.version = 11 : i64} {
  func.func @_base_gnn_kernel(%arg0: memref<32x32xf32, #tpu.memory_space<vmem>>, %arg1: memref<2x32xf32, #tpu.memory_space<vmem>>, %arg2: memref<432x128xf32, #tpu.memory_space<vmem>>, %arg3: memref<2x3xf32, #tpu.memory_space<vmem>>) attributes {dimension_semantics = [], scalar_prefetch = 0 : i64, scratch_operands = 0 : i64, tpu.core_type = #tpu.core_type<tc>} {
    %c0 = arith.constant 0 : index
    %c0_0 = arith.constant 0 : index
    %0 = vector.load %arg0[%c0, %c0_0] : memref<32x32xf32, #tpu.memory_space<vmem>>, vector<32x32xf32>
    %c0_1 = arith.constant 0 : index
    %c0_2 = arith.constant 0 : index
    %1 = vector.load %arg1[%c0_1, %c0_2] : memref<2x32xf32, #tpu.memory_space<vmem>>, vector<2x32xf32>
    %c0_3 = arith.constant 0 : index
    %c0_4 = arith.constant 0 : index
    %2 = vector.load %arg2[%c0_3, %c0_4] : memref<432x128xf32, #tpu.memory_space<vmem>>, vector<32x3xf32>
    %c32 = arith.constant 32 : index
    %c0_5 = arith.constant 0 : index
    %3 = vector.load %arg2[%c32, %c0_5] : memref<432x128xf32, #tpu.memory_space<vmem>>, vector<96x96xf32>
    %c128 = arith.constant 128 : index
    %c0_6 = arith.constant 0 : index
    %4 = vector.load %arg2[%c128, %c0_6] : memref<432x128xf32, #tpu.memory_space<vmem>>, vector<96x96xf32>
    %c224 = arith.constant 224 : index
    %c0_7 = arith.constant 0 : index
    %5 = vector.load %arg2[%c224, %c0_7] : memref<432x128xf32, #tpu.memory_space<vmem>>, vector<96x96xf32>
    %c320 = arith.constant 320 : index
    %c0_8 = arith.constant 0 : index
    %6 = vector.load %arg2[%c320, %c0_8] : memref<432x128xf32, #tpu.memory_space<vmem>>, vector<96x3xf32>
    %c416 = arith.constant 416 : index
    %c0_9 = arith.constant 0 : index
    %7 = vector.load %arg2[%c416, %c0_9] : memref<432x128xf32, #tpu.memory_space<vmem>>, vector<11x96xf32>
    %8 = vector.extract_strided_slice %7 {offsets = [0, 0], sizes = [1, 96], strides = [1, 1]} : vector<11x96xf32> to vector<1x96xf32>
    %9 = vector.extract_strided_slice %7 {offsets = [1, 0], sizes = [1, 96], strides = [1, 1]} : vector<11x96xf32> to vector<1x96xf32>
    %10 = vector.extract_strided_slice %7 {offsets = [2, 0], sizes = [1, 96], strides = [1, 1]} : vector<11x96xf32> to vector<1x96xf32>
    %11 = vector.extract_strided_slice %7 {offsets = [3, 0], sizes = [1, 96], strides = [1, 1]} : vector<11x96xf32> to vector<1x96xf32>
    %12 = vector.extract_strided_slice %7 {offsets = [4, 0], sizes = [1, 96], strides = [1, 1]} : vector<11x96xf32> to vector<1x96xf32>
    %13 = vector.extract_strided_slice %7 {offsets = [5, 0], sizes = [1, 96], strides = [1, 1]} : vector<11x96xf32> to vector<1x96xf32>
    %14 = vector.extract_strided_slice %7 {offsets = [6, 0], sizes = [1, 96], strides = [1, 1]} : vector<11x96xf32> to vector<1x96xf32>
    %15 = vector.extract_strided_slice %7 {offsets = [7, 0], sizes = [1, 96], strides = [1, 1]} : vector<11x96xf32> to vector<1x96xf32>
    %16 = vector.extract_strided_slice %7 {offsets = [8, 0], sizes = [1, 96], strides = [1, 1]} : vector<11x96xf32> to vector<1x96xf32>
    %17 = vector.extract_strided_slice %7 {offsets = [9, 0], sizes = [1, 3], strides = [1, 1]} : vector<11x96xf32> to vector<1x3xf32>
    %18 = vector.extract_strided_slice %7 {offsets = [10, 0], sizes = [1, 3], strides = [1, 1]} : vector<11x96xf32> to vector<1x3xf32>
    %cst = arith.constant dense<0.000000e+00> : vector<32x3xf32>
    %19 = tpu.matmul %0, %2, %cst {dimension_numbers = #tpu.dot_dimension_numbers<[1], [0], [0], [1], [0, 0, 1, 1], [], []>} : vector<32x32xf32>, vector<32x3xf32>, vector<32x3xf32> -> vector<32x3xf32>
    %20 = vector.broadcast %18 : vector<1x3xf32> to vector<32x3xf32>
    %21 = arith.addf %19, %20 : vector<32x3xf32>
    %22 = arith.negf %21 : vector<32x3xf32>
    %23 = math.exp %22 : vector<32x3xf32>
    %cst_10 = arith.constant 1.000000e+00 : f32
    %24 = vector.broadcast %cst_10 : f32 to vector<32x3xf32>
    %25 = arith.addf %24, %23 : vector<32x3xf32>
    %26 = arith.divf %24, %25 : vector<32x3xf32>
    %27 = tpu.transpose %26, [1, 0] : vector<32x3xf32> -> vector<3x32xf32>
    %28 = vector.extract_strided_slice %27 {offsets = [0, 0], sizes = [1, 32], strides = [1, 1]} : vector<3x32xf32> to vector<1x32xf32>
    %29 = vector.broadcast %28 : vector<1x32xf32> to vector<2x32xf32>
    %30 = arith.mulf %1, %29 : vector<2x32xf32>
    %31 = vector.extract_strided_slice %27 {offsets = [1, 0], sizes = [1, 32], strides = [1, 1]} : vector<3x32xf32> to vector<1x32xf32>
    %32 = vector.broadcast %31 : vector<1x32xf32> to vector<2x32xf32>
    %33 = arith.mulf %1, %32 : vector<2x32xf32>
    %34 = vector.extract_strided_slice %27 {offsets = [2, 0], sizes = [1, 32], strides = [1, 1]} : vector<3x32xf32> to vector<1x32xf32>
    %35 = vector.broadcast %34 : vector<1x32xf32> to vector<2x32xf32>
    %36 = arith.mulf %1, %35 : vector<2x32xf32>
    %37 = tpu.concatenate %30, %33, %36 in 0 : vector<2x32xf32>, vector<2x32xf32>, vector<2x32xf32> -> vector<6x32xf32>
    %cst_11 = arith.constant dense<0.000000e+00> : vector<6x32xf32>
    %38 = tpu.matmul %37, %0, %cst_11 {dimension_numbers = #tpu.dot_dimension_numbers<[1], [0], [0], [1], [0, 0, 1, 1], [], []>} : vector<6x32xf32>, vector<32x32xf32>, vector<6x32xf32> -> vector<6x32xf32>
    %39 = vector.extract_strided_slice %38 {offsets = [0, 0], sizes = [2, 32], strides = [1, 1]} : vector<6x32xf32> to vector<2x32xf32>
    %40 = vector.extract_strided_slice %38 {offsets = [2, 0], sizes = [2, 32], strides = [1, 1]} : vector<6x32xf32> to vector<2x32xf32>
    %41 = vector.extract_strided_slice %38 {offsets = [4, 0], sizes = [2, 32], strides = [1, 1]} : vector<6x32xf32> to vector<2x32xf32>
    %42 = tpu.concatenate %39, %40, %41 in 1 : vector<2x32xf32>, vector<2x32xf32>, vector<2x32xf32> -> vector<2x96xf32>
    %cst_12 = arith.constant dense<0.000000e+00> : vector<2x96xf32>
    %43 = tpu.matmul %42, %3, %cst_12 {dimension_numbers = #tpu.dot_dimension_numbers<[1], [0], [0], [1], [0, 0, 1, 1], [], []>} : vector<2x96xf32>, vector<96x96xf32>, vector<2x96xf32> -> vector<2x96xf32>
    %44 = vector.broadcast %8 : vector<1x96xf32> to vector<2x96xf32>
    %45 = arith.addf %43, %44 : vector<2x96xf32>
    %cst_13 = arith.constant 0.000000e+00 : f32
    %46 = vector.broadcast %cst_13 : f32 to vector<2x96xf32>
    %47 = arith.maximumf %45, %46 : vector<2x96xf32>
    %cst_14 = arith.constant dense<0.000000e+00> : vector<96xf32>
    %48 = vector.multi_reduction <add>, %47, %cst_14 [0] : vector<2x96xf32> to vector<96xf32>
    %49 = vector.shape_cast %48 : vector<96xf32> to vector<1x96xf32>
    %cst_15 = arith.constant 2.000000e+00 : f32
    %50 = vector.broadcast %cst_15 : f32 to vector<1x96xf32>
    %51 = arith.divf %49, %50 : vector<1x96xf32>
    %52 = vector.broadcast %51 : vector<1x96xf32> to vector<2x96xf32>
    %53 = arith.subf %47, %52 : vector<2x96xf32>
    %54 = arith.mulf %53, %53 : vector<2x96xf32>
    %cst_16 = arith.constant dense<0.000000e+00> : vector<96xf32>
    %55 = vector.multi_reduction <add>, %54, %cst_16 [0] : vector<2x96xf32> to vector<96xf32>
    %56 = vector.shape_cast %55 : vector<96xf32> to vector<1x96xf32>
    %cst_17 = arith.constant 2.000000e+00 : f32
    %57 = vector.broadcast %cst_17 : f32 to vector<1x96xf32>
    %58 = arith.divf %56, %57 : vector<1x96xf32>
    %cst_18 = arith.constant 9.99999974E-6 : f32
    %59 = vector.broadcast %cst_18 : f32 to vector<1x96xf32>
    %60 = arith.addf %58, %59 : vector<1x96xf32>
    %61 = math.rsqrt %60 : vector<1x96xf32>
    %62 = vector.broadcast %61 : vector<1x96xf32> to vector<2x96xf32>
    %63 = arith.mulf %53, %62 : vector<2x96xf32>
    %64 = vector.broadcast %9 : vector<1x96xf32> to vector<2x96xf32>
    %65 = arith.mulf %63, %64 : vector<2x96xf32>
    %66 = vector.broadcast %10 : vector<1x96xf32> to vector<2x96xf32>
    %67 = arith.addf %65, %66 : vector<2x96xf32>
    %cst_19 = arith.constant dense<0.000000e+00> : vector<2x96xf32>
    %68 = tpu.matmul %67, %4, %cst_19 {dimension_numbers = #tpu.dot_dimension_numbers<[1], [0], [0], [1], [0, 0, 1, 1], [], []>} : vector<2x96xf32>, vector<96x96xf32>, vector<2x96xf32> -> vector<2x96xf32>
    %69 = vector.broadcast %11 : vector<1x96xf32> to vector<2x96xf32>
    %70 = arith.addf %68, %69 : vector<2x96xf32>
    %cst_20 = arith.constant 0.000000e+00 : f32
    %71 = vector.broadcast %cst_20 : f32 to vector<2x96xf32>
    %72 = arith.maximumf %70, %71 : vector<2x96xf32>
    %cst_21 = arith.constant dense<0.000000e+00> : vector<96xf32>
    %73 = vector.multi_reduction <add>, %72, %cst_21 [0] : vector<2x96xf32> to vector<96xf32>
    %74 = vector.shape_cast %73 : vector<96xf32> to vector<1x96xf32>
    %cst_22 = arith.constant 2.000000e+00 : f32
    %75 = vector.broadcast %cst_22 : f32 to vector<1x96xf32>
    %76 = arith.divf %74, %75 : vector<1x96xf32>
    %77 = vector.broadcast %76 : vector<1x96xf32> to vector<2x96xf32>
    %78 = arith.subf %72, %77 : vector<2x96xf32>
    %79 = arith.mulf %78, %78 : vector<2x96xf32>
    %cst_23 = arith.constant dense<0.000000e+00> : vector<96xf32>
    %80 = vector.multi_reduction <add>, %79, %cst_23 [0] : vector<2x96xf32> to vector<96xf32>
    %81 = vector.shape_cast %80 : vector<96xf32> to vector<1x96xf32>
    %cst_24 = arith.constant 2.000000e+00 : f32
    %82 = vector.broadcast %cst_24 : f32 to vector<1x96xf32>
    %83 = arith.divf %81, %82 : vector<1x96xf32>
    %cst_25 = arith.constant 9.99999974E-6 : f32
    %84 = vector.broadcast %cst_25 : f32 to vector<1x96xf32>
    %85 = arith.addf %83, %84 : vector<1x96xf32>
    %86 = math.rsqrt %85 : vector<1x96xf32>
    %87 = vector.broadcast %86 : vector<1x96xf32> to vector<2x96xf32>
    %88 = arith.mulf %78, %87 : vector<2x96xf32>
    %89 = vector.broadcast %12 : vector<1x96xf32> to vector<2x96xf32>
    %90 = arith.mulf %88, %89 : vector<2x96xf32>
    %91 = vector.broadcast %13 : vector<1x96xf32> to vector<2x96xf32>
    %92 = arith.addf %90, %91 : vector<2x96xf32>
    %cst_26 = arith.constant dense<0.000000e+00> : vector<2x96xf32>
    %93 = tpu.matmul %92, %5, %cst_26 {dimension_numbers = #tpu.dot_dimension_numbers<[1], [0], [0], [1], [0, 0, 1, 1], [], []>} : vector<2x96xf32>, vector<96x96xf32>, vector<2x96xf32> -> vector<2x96xf32>
    %94 = vector.broadcast %14 : vector<1x96xf32> to vector<2x96xf32>
    %95 = arith.addf %93, %94 : vector<2x96xf32>
    %cst_27 = arith.constant 0.000000e+00 : f32
    %96 = vector.broadcast %cst_27 : f32 to vector<2x96xf32>
    %97 = arith.maximumf %95, %96 : vector<2x96xf32>
    %cst_28 = arith.constant dense<0.000000e+00> : vector<96xf32>
    %98 = vector.multi_reduction <add>, %97, %cst_28 [0] : vector<2x96xf32> to vector<96xf32>
    %99 = vector.shape_cast %98 : vector<96xf32> to vector<1x96xf32>
    %cst_29 = arith.constant 2.000000e+00 : f32
    %100 = vector.broadcast %cst_29 : f32 to vector<1x96xf32>
    %101 = arith.divf %99, %100 : vector<1x96xf32>
    %102 = vector.broadcast %101 : vector<1x96xf32> to vector<2x96xf32>
    %103 = arith.subf %97, %102 : vector<2x96xf32>
    %104 = arith.mulf %103, %103 : vector<2x96xf32>
    %cst_30 = arith.constant dense<0.000000e+00> : vector<96xf32>
    %105 = vector.multi_reduction <add>, %104, %cst_30 [0] : vector<2x96xf32> to vector<96xf32>
    %106 = vector.shape_cast %105 : vector<96xf32> to vector<1x96xf32>
    %cst_31 = arith.constant 2.000000e+00 : f32
    %107 = vector.broadcast %cst_31 : f32 to vector<1x96xf32>
    %108 = arith.divf %106, %107 : vector<1x96xf32>
    %cst_32 = arith.constant 9.99999974E-6 : f32
    %109 = vector.broadcast %cst_32 : f32 to vector<1x96xf32>
    %110 = arith.addf %108, %109 : vector<1x96xf32>
    %111 = math.rsqrt %110 : vector<1x96xf32>
    %112 = vector.broadcast %111 : vector<1x96xf32> to vector<2x96xf32>
    %113 = arith.mulf %103, %112 : vector<2x96xf32>
    %114 = vector.broadcast %15 : vector<1x96xf32> to vector<2x96xf32>
    %115 = arith.mulf %113, %114 : vector<2x96xf32>
    %116 = vector.broadcast %16 : vector<1x96xf32> to vector<2x96xf32>
    %117 = arith.addf %115, %116 : vector<2x96xf32>
    %cst_33 = arith.constant dense<0.000000e+00> : vector<2x3xf32>
    %118 = tpu.matmul %117, %6, %cst_33 {dimension_numbers = #tpu.dot_dimension_numbers<[1], [0], [0], [1], [0, 0, 1, 1], [], []>} : vector<2x96xf32>, vector<96x3xf32>, vector<2x3xf32> -> vector<2x3xf32>
    %119 = vector.broadcast %17 : vector<1x3xf32> to vector<2x3xf32>
    %120 = arith.addf %118, %119 : vector<2x3xf32>
    %c0_34 = arith.constant 0 : index
    %c0_35 = arith.constant 0 : index
    %121 = vector.load %arg3[%c0_34, %c0_35] : memref<2x3xf32, #tpu.memory_space<vmem>>, vector<2x3xf32>
    tpu.vector_store %arg3[%c0_34, %c0_35], %120 {strides = array<i32>} : memref<2x3xf32, #tpu.memory_space<vmem>>, vector<2x3xf32>,
    return
  }
}

</mosaic_0001>

<llo_original>
// kernel: base_gnn_forward.1
$region0: #{base_gnn_forward.1}
  #allocation0 [shape = 'u32[]', space=smem, size = 0x4, offset = 0x4, fixed_abs, tag = 'smem constant byte address 0x4 - core index']
  #allocation1 [shape = 'u32[72,128]{1,0:T(1,128)}', space=vmem, size = 0x9000, scoped, tag = 'internal scratch']
  %s0 = inlined_call_operand.hbm [shape: f32[32,32], index: 0, kind: input, shape index: {}]
  %s1 = inlined_call_operand.hbm [shape: f32[2,32], index: 1, kind: input, shape index: {}]
  %s2 = inlined_call_operand.hbm [shape: f32[432,128], index: 2, kind: input, shape index: {}]
  %s3 = inlined_call_operand.hbm [shape: f32[2,3], index: 3, kind: output, shape index: {}]
  %s4 = sld [smem:[#allocation0]]
  $region34: #{base_gnn_forward.1} parent=0
    _
  %s6 = ssub.s32 1, %s4
  %s7 = scalar_select 0, %s6, %s4
  $region1: #{base_gnn_forward.1} parent=0
    #allocation2 [shape = 'u8[16384]{0}', space=vmem, size = 0x4000, scoped, tag = 'input window, operand 0, single buffered']
    #allocation3 [shape = 's32[1]{0}', space=sflag, size = 0x4, scoped, tag = 'scoped memory for base_gnn_forward.1']
    #allocation4 [shape = 's32[1]{0}', space=sflag, size = 0x4, scoped, tag = 'scoped memory for base_gnn_forward.1']
    #allocation5 [shape = 'u8[1024]{0}', space=vmem, size = 0x400, scoped, tag = 'input window, operand 1, single buffered']
    #allocation6 [shape = 's32[1]{0}', space=sflag, size = 0x4, scoped, tag = 'scoped memory for base_gnn_forward.1']
    #allocation7 [shape = 'u8[221184]{0}', space=vmem, size = 0x36000, scoped, tag = 'input window, operand 2, single buffered']
    #allocation8 [shape = 'u8[1024]{0}', space=vmem, size = 0x400, scoped, tag = 'output window, operand 0, single buffered']
    %8 = vsyncpa [#allocation3], 0
    %9 = vsyncpa [#allocation6], 0
    %10 = vsyncpa [#allocation4], 0
    // Predicated region
    $region2: #{base_gnn_forward.1} parent=1 // pred_check
      _
    $region3: #{base_gnn_forward.1} parent=1 // pred_check_branch
      %12 = sbr.rel (0) target = $region5
    $region4: #{base_gnn_forward.1} parent=1 // pred_region
      %14 = vsyncadd [#allocation3], 0
      %s15 = sshll.u32 %s0, 4
      %s16 = int_to_ptr.hbm [resolvable:$true] %s15
      %s17 = sshll.u32 [#allocation2], 4
      %s18 = int_to_ptr.vmem [resolvable:$true] %s17
      %23 = dma.hbm_to_vmem [thread:$0]  %s16, 512, %s18, [#allocation3], 128, 128, 8
    $region5: #{base_gnn_forward.1} parent=1 // pred_fallthru
      _
    // Predicated region
    $region6: #{base_gnn_forward.1} parent=1 // pred_check
      _
    $region7: #{base_gnn_forward.1} parent=1 // pred_check_branch
      %25 = sbr.rel (0) target = $region9
    $region8: #{base_gnn_forward.1} parent=1 // pred_region
      %27 = vsyncadd [#allocation6], 0
      %s29 = sshll.u32 %s1, 4
      %s30 = int_to_ptr.hbm [resolvable:$true] %s29
      %s31 = sshll.u32 [#allocation5], 4
      %s32 = int_to_ptr.vmem [resolvable:$true] %s31
      %34 = dma.hbm_to_vmem [thread:$0]  %s30, 32, %s32, [#allocation6]
    $region9: #{base_gnn_forward.1} parent=1 // pred_fallthru
      _
    // Predicated region
    $region10: #{base_gnn_forward.1} parent=1 // pred_check
      _
    $region11: #{base_gnn_forward.1} parent=1 // pred_check_branch
      %36 = sbr.rel (0) target = $region13
    $region12: #{base_gnn_forward.1} parent=1 // pred_region
      %38 = vsyncadd [#allocation6], 0
      %s39 = sshll.u32 %s2, 4
      %s40 = int_to_ptr.hbm [resolvable:$true] %s39
      %s41 = sshll.u32 [#allocation7], 4
      %s42 = int_to_ptr.vmem [resolvable:$true] %s41
      %47 = dma.hbm_to_vmem [thread:$0]  %s40, 6912, %s42, [#allocation6], 128, 128, 8
    $region13: #{base_gnn_forward.1} parent=1 // pred_fallthru
      _
    // Predicated region
    $region14: #{base_gnn_forward.1} parent=1 // pred_check
      _
    $region15: #{base_gnn_forward.1} parent=1 // pred_check_branch
      %49 = sbr.rel (0) target = $region17
    $region16: #{base_gnn_forward.1} parent=1 // pred_region
      %51 = dma.done [#allocation3], 512
    $region17: #{base_gnn_forward.1} parent=1 // pred_fallthru
      _
    // Predicated region
    $region18: #{base_gnn_forward.1} parent=1 // pred_check
      _
    $region19: #{base_gnn_forward.1} parent=1 // pred_check_branch
      %53 = sbr.rel (0) target = $region21
    $region20: #{base_gnn_forward.1} parent=1 // pred_region
      %55 = dma.done [#allocation6], 32
    $region21: #{base_gnn_forward.1} parent=1 // pred_fallthru
      _
    // Predicated region
    $region22: #{base_gnn_forward.1} parent=1 // pred_check
      _
    $region23: #{base_gnn_forward.1} parent=1 // pred_check_branch
      %57 = sbr.rel (0) target = $region25
    $region24: #{base_gnn_forward.1} parent=1 // pred_region
      %59 = dma.done [#allocation6], 6912
    $region25: #{base_gnn_forward.1} parent=1 // pred_fallthru
      _
    %v60 = vld [vmem:[#allocation2] sm:$0xff]
    %v61 = vld [vmem:[#allocation2 + $0x8] sm:$0xff]
    %v62 = vld [vmem:[#allocation2 + $0x10] sm:$0xff]
    %v63 = vld [vmem:[#allocation2 + $0x18] sm:$0xff]
    %v64 = vld [vmem:[#allocation5] sm:$0x3]
    %v65 = vld [vmem:[#allocation7] sm:$0xff]
    %v66 = vld [vmem:[#allocation7 + $0x8] sm:$0xff]
    %v67 = vld [vmem:[#allocation7 + $0x10] sm:$0xff]
    %v68 = vld [vmem:[#allocation7 + $0x18] sm:$0xff]
    %v69 = vld [vmem:[#allocation7 + $0x20] sm:$0xff]
    %v70 = vld [vmem:[#allocation7 + $0x28] sm:$0xff]
    %v71 = vld [vmem:[#allocation7 + $0x30] sm:$0xff]
    %v72 = vld [vmem:[#allocation7 + $0x38] sm:$0xff]
    %v73 = vld [vmem:[#allocation7 + $0x40] sm:$0xff]
    %v74 = vld [vmem:[#allocation7 + $0x48] sm:$0xff]
    %v75 = vld [vmem:[#allocation7 + $0x50] sm:$0xff]
    %v76 = vld [vmem:[#allocation7 + $0x58] sm:$0xff]
    %v77 = vld [vmem:[#allocation7 + $0x60] sm:$0xff]
    %v78 = vld [vmem:[#allocation7 + $0x68] sm:$0xff]
    %v79 = vld [vmem:[#allocation7 + $0x70] sm:$0xff]
    %v80 = vld [vmem:[#allocation7 + $0x78] sm:$0xff]
    %v81 = vld [vmem:[#allocation7 + $0x80] sm:$0xff]
    %v82 = vld [vmem:[#allocation7 + $0x88] sm:$0xff]
    %v83 = vld [vmem:[#allocation7 + $0x90] sm:$0xff]
    %v84 = vld [vmem:[#allocation7 + $0x98] sm:$0xff]
    %v85 = vld [vmem:[#allocation7 + $0xa0] sm:$0xff]
    %v86 = vld [vmem:[#allocation7 + $0xa8] sm:$0xff]
    %v87 = vld [vmem:[#allocation7 + $0xb0] sm:$0xff]
    %v88 = vld [vmem:[#allocation7 + $0xb8] sm:$0xff]
    %v89 = vld [vmem:[#allocation7 + $0xc0] sm:$0xff]
    %v90 = vld [vmem:[#allocation7 + $0xc8] sm:$0xff]
    %v91 = vld [vmem:[#allocation7 + $0xd0] sm:$0xff]
    %v92 = vld [vmem:[#allocation7 + $0xd8] sm:$0xff]
    %v93 = vld [vmem:[#allocation7 + $0xe0] sm:$0xff]
    %v94 = vld [vmem:[#allocation7 + $0xe8] sm:$0xff]
    %v95 = vld [vmem:[#allocation7 + $0xf0] sm:$0xff]
    %v96 = vld [vmem:[#allocation7 + $0xf8] sm:$0xff]
    %v97 = vld [vmem:[#allocation7 + $0x100] sm:$0xff]
    %v98 = vld [vmem:[#allocation7 + $0x108] sm:$0xff]
    %v99 = vld [vmem:[#allocation7 + $0x110] sm:$0xff]
    %v100 = vld [vmem:[#allocation7 + $0x118] sm:$0xff]
    %v101 = vld [vmem:[#allocation7 + $0x120] sm:$0xff]
    %v102 = vld [vmem:[#allocation7 + $0x128] sm:$0xff]
    %v103 = vld [vmem:[#allocation7 + $0x130] sm:$0xff]
    %v104 = vld [vmem:[#allocation7 + $0x138] sm:$0xff]
    %v105 = vld [vmem:[#allocation7 + $0x140] sm:$0xff]
    %v106 = vld [vmem:[#allocation7 + $0x148] sm:$0xff]
    %v107 = vld [vmem:[#allocation7 + $0x150] sm:$0xff]
    %v108 = vld [vmem:[#allocation7 + $0x158] sm:$0xff]
    %v109 = vld [vmem:[#allocation7 + $0x160] sm:$0xff]
    %v110 = vld [vmem:[#allocation7 + $0x168] sm:$0xff]
    %v111 = vld [vmem:[#allocation7 + $0x170] sm:$0xff]
    %v112 = vld [vmem:[#allocation7 + $0x178] sm:$0xff]
    %v113 = vld [vmem:[#allocation7 + $0x180] sm:$0xff]
    %v114 = vld [vmem:[#allocation7 + $0x188] sm:$0xff]
    %v115 = vld [vmem:[#allocation7 + $0x190] sm:$0xff]
    %v116 = vld [vmem:[#allocation7 + $0x198] sm:$0xff]
    %v117 = vld [vmem:[#allocation7 + $0x1a0] sm:$0xff]
    %v118 = vld [vmem:[#allocation7 + $0x1a8] sm:$0x7]
    %v119 = vperm.slane %v118, 2
    %vm120 = vcmask 261120
    %v122 = vsel %vm120, %v60, 0
    %v125 = vsel %vm120, %v61, 0
    %v128 = vsel %vm120, %v62, 0
    %v131 = vsel %vm120, %v63, 0
    %133 = vmatpush.msra.mxu0 0.0
    %134 = vmatpush.msra.mxu0 0.0
    %135 = vmatpush.msra.mxu0 0.0
    %136 = vmatpush.msra.mxu0 0.0
    %137 = vmatpush.msra.mxu0 0.0
    %138 = vmatpush.msra.mxu0 0.0
    %139 = vmatpush.msra.mxu0 0.0
    %140 = vmatpush.msra.mxu0 0.0
    %141 = vmatpush.msra.mxu0 0.0
    %142 = vmatpush.msra.mxu0 0.0
    %143 = vmatpush.msra.mxu0 0.0
    %144 = vmatpush.msra.mxu0 0.0
    %145 = vmatpush.msra.mxu0 %v68
    %146 = vmatpush.msra.mxu0 %v67
    %147 = vmatpush.msra.mxu0 %v66
    %148 = vmatpush.msra.mxu0 %v65
    %149 = vmatmul.f32.gmra.mxu0 %v122
    %v150 = vpop.f32.mrf.mxu0
    %v151 = vadd.f32 %v119, %v150
    %152 = vmatmul.f32.gmra.mxu0 %v125
    %v153 = vpop.f32.mrf.mxu0
    %v154 = vadd.f32 %v119, %v153
    %155 = vmatmul.f32.gmra.mxu0 %v128
    %v156 = vpop.f32.mrf.mxu0
    %v157 = vadd.f32 %v119, %v156
    %158 = vmatmul.f32.gmra.mxu0 %v131
    %v159 = vpop.f32.mrf.mxu0
    %v160 = vadd.f32 %v119, %v159
    %161 = vdwg.mxu0
    %v162 = vxor.u32 %v151, 2147483648
    %v163 = vxor.u32 %v154, 2147483648
    %v164 = vxor.u32 %v157, 2147483648
    %v165 = vxor.u32 %v160, 2147483648
    %v166 = vmul.f32 %v162, 1.442695
    %v167 = vpow.pop %v166
    %v168 = vmul.f32 %v163, 1.442695
    %v169 = vpow.pop %v168
    %v170 = vmul.f32 %v164, 1.442695
    %v171 = vpow.pop %v170
    %v172 = vmul.f32 %v165, 1.442695
    %v173 = vpow.pop %v172
    %v174 = vadd.f32 %v167, 1.0
    %v175 = vadd.f32 %v169, 1.0
    %v176 = vadd.f32 %v171, 1.0
    %v177 = vadd.f32 %v173, 1.0
    %v178 = vrcp.pop %v174
    %v179 = vmul.f32 %v174, %v178
    %v180 = vsub.f32 1.0, %v179
    %v181 = vmul.f32 %v178, %v180
    %v182 = vadd.f32 %v178, %v181
    %vm183 = vweird.f32 %v174
    %vm184 = vweird.f32 %v178
    %vm185 = vmor %vm183, %vm184
    %v186 = vsel %vm185, %v178, %v182
    %v187 = vand.u32 2147483647, %v174
    %vm188 = vcmp.eq.f32.partialorder %v187, 8.507059e+37
    %v189 = vand.u32 %v174, 2147483648
    %v190 = vor.u32 1.1754944e-38, %v189
    %v191 = vsel %vm188, %v190, %v186
    %v192 = vmul.f32 1.0, %v191
    %v193 = vrcp.pop %v175
    %v194 = vmul.f32 %v175, %v193
    %v195 = vsub.f32 1.0, %v194
    %v196 = vmul.f32 %v193, %v195
    %v197 = vadd.f32 %v193, %v196
    %vm198 = vweird.f32 %v175
    %vm199 = vweird.f32 %v193
    %vm200 = vmor %vm198, %vm199
    %v201 = vsel %vm200, %v193, %v197
    %v202 = vand.u32 2147483647, %v175
    %vm203 = vcmp.eq.f32.partialorder %v202, 8.507059e+37
    %v204 = vand.u32 %v175, 2147483648
    %v205 = vor.u32 1.1754944e-38, %v204
    %v206 = vsel %vm203, %v205, %v201
    %v207 = vmul.f32 1.0, %v206
    %v208 = vrcp.pop %v176
    %v209 = vmul.f32 %v176, %v208
    %v210 = vsub.f32 1.0, %v209
    %v211 = vmul.f32 %v208, %v210
    %v212 = vadd.f32 %v208, %v211
    %vm213 = vweird.f32 %v176
    %vm214 = vweird.f32 %v208
    %vm215 = vmor %vm213, %vm214
    %v216 = vsel %vm215, %v208, %v212
    %v217 = vand.u32 2147483647, %v176
    %vm218 = vcmp.eq.f32.partialorder %v217, 8.507059e+37
    %v219 = vand.u32 %v176, 2147483648
    %v220 = vor.u32 1.1754944e-38, %v219
    %v221 = vsel %vm218, %v220, %v216
    %v222 = vmul.f32 1.0, %v221
    %v223 = vrcp.pop %v177
    %v224 = vmul.f32 %v177, %v223
    %v225 = vsub.f32 1.0, %v224
    %v226 = vmul.f32 %v223, %v225
    %v227 = vadd.f32 %v223, %v226
    %vm228 = vweird.f32 %v177
    %vm229 = vweird.f32 %v223
    %vm230 = vmor %vm228, %vm229
    %v231 = vsel %vm230, %v223, %v227
    %v232 = vand.u32 2147483647, %v177
    %vm233 = vcmp.eq.f32.partialorder %v232, 8.507059e+37
    %v234 = vand.u32 %v177, 2147483648
    %v235 = vor.u32 1.1754944e-38, %v234
    %v236 = vsel %vm233, %v235, %v231
    %v237 = vmul.f32 1.0, %v236
    %238 = vxpose.xlu0.b32.start [1/16] %v192, 128
    %239 = vxpose.xlu0.b32.cont [2/16] %v207, 128
    %240 = vxpose.xlu0.b32.cont [3/16] %v222, 128
    %241 = vxpose.xlu0.b32.cont [4/16] %v237, 128
    %242 = vxpose.xlu0.b32.cont [5/16] 0.0, 128
    %243 = vxpose.xlu0.b32.cont [6/16] 0.0, 128
    %244 = vxpose.xlu0.b32.cont [7/16] 0.0, 128
    %245 = vxpose.xlu0.b32.cont [8/16] 0.0, 128
    %246 = vxpose.xlu0.b32.cont [9/16] 0.0, 128
    %247 = vxpose.xlu0.b32.cont [10/16] 0.0, 128
    %248 = vxpose.xlu0.b32.cont [11/16] 0.0, 128
    %249 = vxpose.xlu0.b32.cont [12/16] 0.0, 128
    %250 = vxpose.xlu0.b32.cont [13/16] 0.0, 128
    %251 = vxpose.xlu0.b32.cont [14/16] 0.0, 128
    %252 = vxpose.xlu0.b32.cont [15/16] 0.0, 128
    %253 = vxpose.xlu0.b32.end [16/16] 0.0, 128
    %v254 = vpop.trf.xlu0
    %v255 = vpop.trf.xlu0
    %v256 = vpop.trf.xlu0
    %v257 = vpop.trf.xlu0
    %v258 = vpop.trf.xlu0
    %v259 = vpop.trf.xlu0
    %v260 = vpop.trf.xlu0
    %v261 = vpop.trf.xlu0
    %v262 = vpop.trf.xlu0
    %v263 = vpop.trf.xlu0
    %v264 = vpop.trf.xlu0
    %v265 = vpop.trf.xlu0
    %v266 = vpop.trf.xlu0
    %v267 = vpop.trf.xlu0
    %v268 = vpop.trf.xlu0
    %v269 = vpop.trf.xlu0
    %v270 = vperm.slane %v254, 0
    %v271 = vmul.f32 %v64, %v270
    %v272 = vperm.slane %v254, 1
    %v273 = vmul.f32 %v64, %v272
    %v274 = vperm.slane %v254, 2
    %v275 = vmul.f32 %v64, %v274
    %v277 = vrot.slane %v273, 6
    %v280 = vrot.slane %v275, 4
    %vm282 = vcmask 1041408
    %v283 = vsel %vm282, %v271, %v277
    %vm284 = vcmask 1043456
    %v285 = vsel %vm284, %v283, %v280
    %v287 = vsel %vm120, %v285, 0
    %289 = vmatpush.msra.mxu0 0.0
    %290 = vmatpush.msra.mxu0 0.0
    %291 = vmatpush.msra.mxu0 0.0
    %292 = vmatpush.msra.mxu0 0.0
    %293 = vmatpush.msra.mxu0 0.0
    %294 = vmatpush.msra.mxu0 0.0
    %295 = vmatpush.msra.mxu0 0.0
    %296 = vmatpush.msra.mxu0 0.0
    %297 = vmatpush.msra.mxu0 0.0
    %298 = vmatpush.msra.mxu0 0.0
    %299 = vmatpush.msra.mxu0 0.0
    %300 = vmatpush.msra.mxu0 0.0
    %301 = vmatpush.msra.mxu0 %v63
    %302 = vmatpush.msra.mxu0 %v62
    %303 = vmatpush.msra.mxu0 %v61
    %304 = vmatpush.msra.mxu0 %v60
    %305 = vmatmul.f32.gmra.mxu0 %v287
    %v306 = vpop.f32.mrf.mxu0
    %v307 = vadd.f32 0.0, %v306
    %308 = vdwg.mxu0
    %v310 = vrot.slane %v307, 2
    %311 = vrot.lane.b32.xlu0 %v310, 32
    %v312 = vpop.permute.xlu0 %311
    %v314 = vrot.slane %v307, 4
    %315 = vrot.lane.b32.xlu0 %v314, 64
    %v316 = vpop.permute.xlu0 %315
    %v318 = vsel %vm120, %v307, %v312
    %vm319 = vcmask 523264
    %v320 = vsel %vm319, %v318, %v316
    %v321 = vperm.slane %v117, 0
    %vm322 = vcmask 785408
    %v324 = vsel %vm322, %v320, 0
    %326 = vmatpush.msra.mxu0 0.0
    %327 = vmatpush.msra.mxu0 0.0
    %328 = vmatpush.msra.mxu0 0.0
    %329 = vmatpush.msra.mxu0 0.0
    %330 = vmatpush.msra.mxu0 %v80
    %331 = vmatpush.msra.mxu0 %v79
    %332 = vmatpush.msra.mxu0 %v78
    %333 = vmatpush.msra.mxu0 %v77
    %334 = vmatpush.msra.mxu0 %v76
    %335 = vmatpush.msra.mxu0 %v75
    %336 = vmatpush.msra.mxu0 %v74
    %337 = vmatpush.msra.mxu0 %v73
    %338 = vmatpush.msra.mxu0 %v72
    %339 = vmatpush.msra.mxu0 %v71
    %340 = vmatpush.msra.mxu0 %v70
    %341 = vmatpush.msra.mxu0 %v69
    %342 = vmatmul.f32.gmra.mxu0 %v324
    %v343 = vpop.f32.mrf.mxu0
    %v344 = vadd.f32 %v321, %v343
    %345 = vdwg.mxu0
    %v346 = vmax.f32 %v344, 0.0
    %vm347 = vcmask 779264
    %v348 = vsel %vm347, %v346, 0.0
    %v349 = vrot.slane %v348, 4
    %v350 = vadd.f32 %v348, %v349
    %v351 = vrot.slane %v350, 2
    %v352 = vadd.f32 %v350, %v351
    %v353 = vrot.slane %v352, 1
    %v354 = vadd.f32 %v352, %v353
    %v355 = vrcp.pop 2.0
    %v356 = vmul.f32 2.0, %v355
    %v357 = vsub.f32 1.0, %v356
    %v358 = vmul.f32 %v355, %v357
    %v359 = vadd.f32 %v355, %v358
    %vm360 = vweird.f32 %v355
    %v361 = vsel %vm360, %v355, %v359
    %v362 = vmul.f32 %v354, %v361
    %v363 = vsub.f32 %v346, %v362
    %v364 = vmul.f32 %v363, %v363
    %v365 = vsel %vm347, %v364, 0.0
    %v366 = vrot.slane %v365, 4
    %v367 = vadd.f32 %v365, %v366
    %v368 = vrot.slane %v367, 2
    %v369 = vadd.f32 %v367, %v368
    %v370 = vrot.slane %v369, 1
    %v371 = vadd.f32 %v369, %v370
    %v372 = vmul.f32 %v371, %v361
    %v373 = vadd.f32 %v372, 1e-05
    %v374 = vrsqrt.pop %v373
    %v375 = vmul.f32 %v374, %v373
    %v376 = vmul.f32 %v375, %v374
    %v377 = vmul.f32 0.5, %v376
    %v378 = vsub.f32 1.5, %v377
    %v379 = vmul.f32 %v374, %v378
    %vm380 = vweird.f32 %v373
    %vm381 = vweird.f32 %v374
    %vm382 = vmor %vm380, %vm381
    %v383 = vsel %vm382, %v374, %v379
    %v384 = vmul.f32 %v363, %v383
    %v385 = vperm.slane %v117, 1
    %v386 = vmul.f32 %v384, %v385
    %v387 = vperm.slane %v117, 2
    %v388 = vadd.f32 %v386, %v387
    %v389 = vperm.slane %v117, 3
    %v391 = vsel %vm322, %v388, 0
    %393 = vmatpush.msra.mxu0 0.0
    %394 = vmatpush.msra.mxu0 0.0
    %395 = vmatpush.msra.mxu0 0.0
    %396 = vmatpush.msra.mxu0 0.0
    %397 = vmatpush.msra.mxu0 %v92
    %398 = vmatpush.msra.mxu0 %v91
    %399 = vmatpush.msra.mxu0 %v90
    %400 = vmatpush.msra.mxu0 %v89
    %401 = vmatpush.msra.mxu0 %v88
    %402 = vmatpush.msra.mxu0 %v87
    %403 = vmatpush.msra.mxu0 %v86
    %404 = vmatpush.msra.mxu0 %v85
    %405 = vmatpush.msra.mxu0 %v84
    %406 = vmatpush.msra.mxu0 %v83
    %407 = vmatpush.msra.mxu0 %v82
    %408 = vmatpush.msra.mxu0 %v81
    %409 = vmatmul.f32.gmra.mxu0 %v391
    %v410 = vpop.f32.mrf.mxu0
    %v411 = vadd.f32 %v389, %v410
    %412 = vdwg.mxu0
    %v413 = vmax.f32 %v411, 0.0
    %v414 = vsel %vm347, %v413, 0.0
    %v415 = vrot.slane %v414, 4
    %v416 = vadd.f32 %v414, %v415
    %v417 = vrot.slane %v416, 2
    %v418 = vadd.f32 %v416, %v417
    %v419 = vrot.slane %v418, 1
    %v420 = vadd.f32 %v418, %v419
    %v421 = vmul.f32 %v420, %v361
    %v422 = vsub.f32 %v413, %v421
    %v423 = vmul.f32 %v422, %v422
    %v424 = vsel %vm347, %v423, 0.0
    %v425 = vrot.slane %v424, 4
    %v426 = vadd.f32 %v424, %v425
    %v427 = vrot.slane %v426, 2
    %v428 = vadd.f32 %v426, %v427
    %v429 = vrot.slane %v428, 1
    %v430 = vadd.f32 %v428, %v429
    %v431 = vmul.f32 %v430, %v361
    %v432 = vadd.f32 %v431, 1e-05
    %v433 = vrsqrt.pop %v432
    %v434 = vmul.f32 %v433, %v432
    %v435 = vmul.f32 %v434, %v433
    %v436 = vmul.f32 0.5, %v435
    %v437 = vsub.f32 1.5, %v436
    %v438 = vmul.f32 %v433, %v437
    %vm439 = vweird.f32 %v432
    %vm440 = vweird.f32 %v433
    %vm441 = vmor %vm439, %vm440
    %v442 = vsel %vm441, %v433, %v438
    %v443 = vmul.f32 %v422, %v442
    %v444 = vperm.slane %v117, 4
    %v445 = vmul.f32 %v443, %v444
    %v446 = vperm.slane %v117, 5
    %v447 = vadd.f32 %v445, %v446
    %v448 = vperm.slane %v117, 6
    %v450 = vsel %vm322, %v447, 0
    %452 = vmatpush.msra.mxu0 0.0
    %453 = vmatpush.msra.mxu0 0.0
    %454 = vmatpush.msra.mxu0 0.0
    %455 = vmatpush.msra.mxu0 0.0
    %456 = vmatpush.msra.mxu0 %v104
    %457 = vmatpush.msra.mxu0 %v103
    %458 = vmatpush.msra.mxu0 %v102
    %459 = vmatpush.msra.mxu0 %v101
    %460 = vmatpush.msra.mxu0 %v100
    %461 = vmatpush.msra.mxu0 %v99
    %462 = vmatpush.msra.mxu0 %v98
    %463 = vmatpush.msra.mxu0 %v97
    %464 = vmatpush.msra.mxu0 %v96
    %465 = vmatpush.msra.mxu0 %v95
    %466 = vmatpush.msra.mxu0 %v94
    %467 = vmatpush.msra.mxu0 %v93
    %468 = vmatmul.f32.gmra.mxu0 %v450
    %v469 = vpop.f32.mrf.mxu0
    %v470 = vadd.f32 %v448, %v469
    %471 = vdwg.mxu0
    %v472 = vmax.f32 %v470, 0.0
    %v473 = vsel %vm347, %v472, 0.0
    %v474 = vrot.slane %v473, 4
    %v475 = vadd.f32 %v473, %v474
    %v476 = vrot.slane %v475, 2
    %v477 = vadd.f32 %v475, %v476
    %v478 = vrot.slane %v477, 1
    %v479 = vadd.f32 %v477, %v478
    %v480 = vmul.f32 %v479, %v361
    %v481 = vsub.f32 %v472, %v480
    %v482 = vmul.f32 %v481, %v481
    %v483 = vsel %vm347, %v482, 0.0
    %v484 = vrot.slane %v483, 4
    %v485 = vadd.f32 %v483, %v484
    %v486 = vrot.slane %v485, 2
    %v487 = vadd.f32 %v485, %v486
    %v488 = vrot.slane %v487, 1
    %v489 = vadd.f32 %v487, %v488
    %v490 = vmul.f32 %v489, %v361
    %v491 = vadd.f32 %v490, 1e-05
    %v492 = vrsqrt.pop %v491
    %v493 = vmul.f32 %v492, %v491
    %v494 = vmul.f32 %v493, %v492
    %v495 = vmul.f32 0.5, %v494
    %v496 = vsub.f32 1.5, %v495
    %v497 = vmul.f32 %v492, %v496
    %vm498 = vweird.f32 %v491
    %vm499 = vweird.f32 %v492
    %vm500 = vmor %vm498, %vm499
    %v501 = vsel %vm500, %v492, %v497
    %v502 = vmul.f32 %v481, %v501
    %v503 = vperm.slane %v117, 7
    %v504 = vmul.f32 %v502, %v503
    %v505 = vperm.slane %v118, 0
    %v506 = vadd.f32 %v504, %v505
    %v507 = vperm.slane %v118, 1
    %v509 = vsel %vm322, %v506, 0
    %511 = vmatpush.msra.mxu0 0.0
    %512 = vmatpush.msra.mxu0 0.0
    %513 = vmatpush.msra.mxu0 0.0
    %514 = vmatpush.msra.mxu0 0.0
    %515 = vmatpush.msra.mxu0 %v116
    %516 = vmatpush.msra.mxu0 %v115
    %517 = vmatpush.msra.mxu0 %v114
    %518 = vmatpush.msra.mxu0 %v113
    %519 = vmatpush.msra.mxu0 %v112
    %520 = vmatpush.msra.mxu0 %v111
    %521 = vmatpush.msra.mxu0 %v110
    %522 = vmatpush.msra.mxu0 %v109
    %523 = vmatpush.msra.mxu0 %v108
    %524 = vmatpush.msra.mxu0 %v107
    %525 = vmatpush.msra.mxu0 %v106
    %526 = vmatpush.msra.mxu0 %v105
    %527 = vmatmul.f32.gmra.mxu0 %v509
    %v528 = vpop.f32.mrf.mxu0
    %v529 = vadd.f32 %v507, %v528
    %530 = vdwg.mxu0
    %vm531 = vcmask 17408
    %532 = vst.msk [vmem:[#allocation8] sm:$0x3] %vm531, %v529
    // Predicated region
    $region26: #{base_gnn_forward.1} parent=1 // pred_check
      _
    $region27: #{base_gnn_forward.1} parent=1 // pred_check_branch
      %534 = sbr.rel (0) target = $region29
    $region28: #{base_gnn_forward.1} parent=1 // pred_region
      %536 = vsyncadd [#allocation4], 0
      %s538 = sshll.u32 [#allocation8], 4
      %s539 = int_to_ptr.vmem [resolvable:$true] %s538
      %s540 = sshll.u32 %s3, 4
      %s541 = int_to_ptr.hbm [resolvable:$true] %s540
      %543 = dma.vmem_to_hbm [thread:$0]  %s539, 32, %s541, [#allocation4]
    $region29: #{base_gnn_forward.1} parent=1 // pred_fallthru
      _
    // Predicated region
    $region30: #{base_gnn_forward.1} parent=1 // pred_check
      _
    $region31: #{base_gnn_forward.1} parent=1 // pred_check_branch
      %545 = sbr.rel (0) target = $region33
    $region32: #{base_gnn_forward.1} parent=1 // pred_region
      %547 = dma.done [#allocation4], 32
    $region33: #{base_gnn_forward.1} parent=1 // pred_fallthru
      _
    %548 = vsyncpa [#allocation3], 1
    %549 = vsyncpa [#allocation6], 1
    %550 = vsyncpa [#allocation4], 1

</llo_original>
